<compile_context>
chip_gen: v7x
topology: tpu7x:2x2x1
jax: 0.10.0
libtpu: 0.0.40
codegen_flags: <defaults>
</compile_context>

<pallas_src>
import functools

import jax
import jax.numpy as jnp
from jax.experimental import pallas as pl
from jax.experimental.pallas import tpu as pltpu


def _static_int_pow(x, p: int):
    """x**p for static integer p >= 1 via exponentiation-by-squaring (VPU muls only)."""
    assert p >= 1
    result = None
    base = x
    while p > 0:
        if p & 1:
            result = base if result is None else result * base
        p >>= 1
        if p:
            base = base * base
    return result


def _mic_normalize_kernel_p2(x_ref, o_ref):
    # block: (bB, C, tHW); normalize along axis=1 (C).
    xf = x_ref[...].astype(jnp.float32)
    ssq = jnp.sum(xf * xf, axis=1, keepdims=True)           # (bB, 1, tHW), f32
    inv = jax.lax.rsqrt(ssq).astype(x_ref.dtype)            # EUP, per column only
    o_ref[...] = x_ref[...] * inv                           # VPU, input dtype


def _mic_normalize_kernel_intp(x_ref, o_ref, *, power: int):
    # Matches torch: x.pow(p).sum(1).pow(1/p) (NOT |x|^p) -- sign / NaN
    # behaviour for negative inputs and odd p follows the module exactly.
    xf = x_ref[...].astype(jnp.float32)
    s = jnp.sum(_static_int_pow(xf, power), axis=1, keepdims=True)   # f32
    # s ** (-1/p) via exp/log: per-column only, lands on the EUP slot.
    inv = jnp.exp(jnp.log(s) * (-1.0 / power)).astype(x_ref.dtype)
    o_ref[...] = x_ref[...] * inv


def _mic_normalize_kernel_floatp(x_ref, o_ref, *, power: float):
    # Non-integer power fallback (rare): per-element pow via exp/log.
    xf = x_ref[...].astype(jnp.float32)
    xp = jnp.exp(jnp.log(xf) * power)                       # matches x**p semantics
    s = jnp.sum(xp, axis=1, keepdims=True)
    inv = jnp.exp(jnp.log(s) * (-1.0 / power)).astype(x_ref.dtype)
    o_ref[...] = x_ref[...] * inv


def _sublane_pad(c: int, itemsize: int) -> int:
    """Channels padded to a full sublane group (8 for 32-bit, 16 for 16-bit)."""
    group = 8 * max(1, 4 // max(1, itemsize))
    return ((c + group - 1) // group) * group


def _largest_divisor_leq(n: int, cap: int) -> int:
    cap = max(1, min(n, cap))
    for d in range(cap, 0, -1):
        if n % d == 0:
            return d
    return 1


# ~3 MiB per buffer; Pallas double-buffers input + output => ~4x this in VMEM,
# plus small f32 internal scratch -> comfortably under the 32 MiB limit below
# and well within v7x's 64 MiB physical VMEM.
_PER_BUFFER_BUDGET = 3 * 1024 * 1024


def _choose_tiling(B: int, C: int, HW_pad: int, itemsize: int,
                   budget: int = _PER_BUFFER_BUDGET):
    """Returns (bB, t_hw): batch items and lane-dense HW columns per grid step."""
    col_bytes = _sublane_pad(C, itemsize) * itemsize
    max_lanes = max(128, ((budget // col_bytes) // 128) * 128)
    if HW_pad <= max_lanes:
        t_hw = HW_pad
        # Pack several batch items per step when C*HW is small so the fixed
        # per-grid-step overhead doesn't dominate DMA time.
        max_bb = max(1, budget // (col_bytes * t_hw))
        bB = _largest_divisor_leq(B, max_bb)
    else:
        t_hw = max_lanes
        bB = 1
    # Megacore: ensure >= 2 grid steps whenever the work can be split so both
    # TensorCores (v7x) / megacore halves get work.
    if (B // bB) * pl.cdiv(HW_pad, t_hw) < 2:
        if bB > 1:
            bB = _largest_divisor_leq(B, B // 2)
        elif t_hw >= 256:
            t_hw = ((t_hw // 2 + 127) // 128) * 128
    return bB, t_hw


def _vmem_limit_bytes() -> int:
    limit = 32 * 1024 * 1024
    try:
        cap = pltpu.get_tpu_info().vmem_capacity_bytes
        limit = min(limit, cap // 2)
    except Exception:
        pass
    return limit


def mic_normalize(x: jax.Array, power: int = 2, dim: int = 1) -> jax.Array:
    """Pallas implementation of MICNormalize.forward(x, dim=1)."""
    assert dim == 1, "kernel layout assumes normalization along dim=1 (channels)"
    B, C, H, W = x.shape
    HW = H * W
    x3 = x.reshape(B, C, HW)

    # Keep the output lane-dense: pad HW to a multiple of 128 so all stores
    # are unmasked full-lane vst; padded columns are sliced off afterwards.
    HW_pad = pl.cdiv(HW, 128) * 128
    if HW_pad != HW:
        x3 = jnp.pad(x3, ((0, 0), (0, 0), (0, HW_pad - HW)))

    itemsize = jnp.dtype(x.dtype).itemsize
    bB, t_hw = _choose_tiling(B, C, HW_pad, itemsize)
    grid = (B // bB, pl.cdiv(HW_pad, t_hw))

    p_is_int = float(power) == int(power)
    if p_is_int and int(power) == 2:
        kernel = _mic_normalize_kernel_p2
        flops = 3 * B * C * HW
        transcendentals = B * HW                       # per-column rsqrt
    elif p_is_int and int(power) >= 1:
        kernel = functools.partial(_mic_normalize_kernel_intp, power=int(power))
        flops = (int(power) + 1) * B * C * HW          # VPU muls + sum + final mul
        transcendentals = 2 * B * HW                   # per-column log + exp
    else:
        kernel = functools.partial(_mic_normalize_kernel_floatp, power=float(power))
        flops = 3 * B * C * HW
        transcendentals = 2 * B * C * HW + 2 * B * HW  # per-element pow + per-column root

    cost = pl.CostEstimate(
        flops=flops,
        transcendentals=transcendentals,
        bytes_accessed=2 * B * C * HW * itemsize,
    )

    out3 = pl.pallas_call(
        kernel,
        out_shape=jax.ShapeDtypeStruct((B, C, HW_pad), x.dtype),
        grid=grid,
        in_specs=[pl.BlockSpec((bB, C, t_hw), lambda b, t: (b, 0, t))],
        out_specs=pl.BlockSpec((bB, C, t_hw), lambda b, t: (b, 0, t)),
        compiler_params=pltpu.CompilerParams(
            dimension_semantics=("parallel", "parallel"),
            vmem_limit_bytes=_vmem_limit_bytes(),
        ),
        cost_estimate=cost,
    )(x3)

    if HW_pad != HW:
        out3 = out3[:, :, :HW]
    return out3.reshape(B, C, H, W)


def mic_normalize_ref(x: jax.Array, power: int = 2, dim: int = 1) -> jax.Array:
    norm = jnp.sum(x ** power, axis=dim, keepdims=True) ** (1.0 / power)
    return x / norm


if __name__ == "__main__":
    key = jax.random.PRNGKey(0)
    # small NCHW input consistent with the module's usage
    x = jax.random.normal(key, (2, 4, 16, 16), dtype=jnp.float32)

    # power == 2 (rsqrt fast path)
    out2 = jax.block_until_ready(mic_normalize(x, power=2, dim=1))
    ref2 = mic_normalize_ref(x, power=2, dim=1)
    assert out2.shape == x.shape
    assert jnp.allclose(out2, ref2, atol=1e-5, rtol=1e-5), "p=2 mismatch vs reference"

    # general integer-power path (positive inputs so the odd-power norm is well defined)
    xp = jnp.abs(x) + 0.1
    out3 = jax.block_until_ready(mic_normalize(xp, power=3, dim=1))
    ref3 = mic_normalize_ref(xp, power=3, dim=1)
    assert jnp.allclose(out3, ref3, atol=1e-4, rtol=1e-4), "p=3 mismatch vs reference"

    # non-128-aligned spatial size exercises the lane-dense padding path
    x7 = jax.random.normal(jax.random.PRNGKey(1), (2, 4, 7, 7), dtype=jnp.float32)
    out7 = jax.block_until_ready(mic_normalize(x7, power=2, dim=1))
    ref7 = mic_normalize_ref(x7, power=2, dim=1)
    assert jnp.allclose(out7, ref7, atol=1e-5, rtol=1e-5), "padded-HW mismatch vs reference"

    print("KERNEL_OK")
</pallas_src>

<mosaic_0001>
module attributes {stable_mosaic.version = 11 : i64} {
  func.func @_mic_normalize_kernel_p2(%arg0: i32, %arg1: i32, %arg2: memref<1x4x256xf32, #tpu.memory_space<vmem>>, %arg3: memref<1x4x256xf32, #tpu.memory_space<vmem>>) attributes {dimension_semantics = [#tpu.dimension_semantics<parallel>, #tpu.dimension_semantics<parallel>], iteration_bounds = array<i64: 2, 1>, scalar_prefetch = 0 : i64, scratch_operands = 0 : i64, tpu.core_type = #tpu.core_type<tc>, window_params = [{transform_indices = @transform_0, window_bounds = array<i64: 1, 4, 256>}, {transform_indices = @transform_1, window_bounds = array<i64: 1, 4, 256>}]} {
    %c0 = arith.constant 0 : index
    %c0_0 = arith.constant 0 : index
    %c0_1 = arith.constant 0 : index
    %0 = vector.load %arg2[%c0, %c0_0, %c0_1] : memref<1x4x256xf32, #tpu.memory_space<vmem>>, vector<1x4x256xf32>
    %1 = arith.mulf %0, %0 : vector<1x4x256xf32>
    %cst = arith.constant dense<0.000000e+00> : vector<1x256xf32>
    %2 = vector.multi_reduction <add>, %1, %cst [1] : vector<1x4x256xf32> to vector<1x256xf32>
    %3 = vector.shape_cast %2 : vector<1x256xf32> to vector<1x1x256xf32>
    %4 = math.rsqrt %3 : vector<1x1x256xf32>
    %c0_2 = arith.constant 0 : index
    %c0_3 = arith.constant 0 : index
    %c0_4 = arith.constant 0 : index
    %5 = vector.load %arg2[%c0_2, %c0_3, %c0_4] : memref<1x4x256xf32, #tpu.memory_space<vmem>>, vector<1x4x256xf32>
    %6 = vector.broadcast %4 : vector<1x1x256xf32> to vector<1x4x256xf32>
    %7 = arith.mulf %5, %6 : vector<1x4x256xf32>
    %c0_5 = arith.constant 0 : index
    %c0_6 = arith.constant 0 : index
    %c0_7 = arith.constant 0 : index
    %8 = vector.load %arg3[%c0_5, %c0_6, %c0_7] : memref<1x4x256xf32, #tpu.memory_space<vmem>>, vector<1x4x256xf32>
    tpu.vector_store %arg3[%c0_5, %c0_6, %c0_7], %7 {strides = array<i32>} : memref<1x4x256xf32, #tpu.memory_space<vmem>>, vector<1x4x256xf32>,
    return
  }
  func.func @transform_0(%arg0: i32, %arg1: i32) -> (i32, i32, i32) {
    %c0_i32 = arith.constant 0 : i32
    %c0_i32_0 = arith.constant 0 : i32
    return %arg0, %c0_i32, %arg1 : i32, i32, i32
  }
  func.func @transform_1(%arg0: i32, %arg1: i32) -> (i32, i32, i32) {
    %c0_i32 = arith.constant 0 : i32
    %c0_i32_0 = arith.constant 0 : i32
    return %arg0, %c0_i32, %arg1 : i32, i32, i32
  }
}

</mosaic_0001>

<llo_original>
// kernel: tpu_custom_call.1
$region0: #{tpu_custom_call.1}
  #allocation0 [shape = 'u32[]', space=smem, size = 0x4, offset = 0x4, fixed_abs, tag = 'smem constant byte address 0x4 - core index']
  #allocation1 [shape = 'u32[144,128]{1,0:T(1,128)}', space=vmem, size = 0x12000, scoped, tag = 'internal scratch']
  %s0 = inlined_call_operand.hbm [shape: f32[2,4,256], index: 0, kind: input, shape index: {}]
  %s1 = inlined_call_operand.hbm [shape: f32[2,4,256], index: 1, kind: output, shape index: {}]
  %s2 = sld [smem:[#allocation0]]
  $region41: #{tpu_custom_call.1} parent=0
    _
  %s4 = ssub.s32 1, %s2
  %s5 = scalar_select 0, %s4, %s2
  $region1: #{tpu_custom_call.1} parent=0
    #allocation2 [shape = 'u8[8192]{0}', space=vmem, size = 0x2000, scoped, tag = 'input window, operand 0']
    #allocation3 [shape = 's32[2]{0}', space=sflag, size = 0x8, scoped, tag = 'scoped memory for tpu_custom_call.1']
    #allocation4 [shape = 's32[2]{0}', space=sflag, size = 0x8, scoped, tag = 'scoped memory for tpu_custom_call.1']
    #allocation5 [shape = 'u8[8192]{0}', space=vmem, size = 0x2000, scoped, tag = 'output window, operand 0']
    %6 = vsyncpa [#allocation3], 0
    %s7 = scalar_lea.sflag [#allocation3], 1
    %8 = vsyncpa %s7, 0
    %9 = vsyncpa [#allocation4], 0
    %s10 = scalar_lea.sflag [#allocation4], 1
    %11 = vsyncpa %s10, 0
    loop: start=0, step=1, limit=4
    $region2: #{tpu_custom_call.1} parent=1 // loop_pre_header
      _
    $region3: #{tpu_custom_call.1} parent=1 // loop_header
      %s13 = sphi 0, %s17
      %p14 = scmp.ge.s32.totalorder %s13, 4
      %s20 = sphi 0, %s32
      %s21 = sphi 0, %s28
      %s22 = sphi 0, %s20
      %s23 = sphi 0, %s21
      %s24 = sphi 0, %s22
      %s25 = sphi 0, %s23
      %s37 = sphi 0, %s39
      %s40 = sphi 0, %s37
      %s41 = sphi 0, %s40
      %s57 = sphi 0, %s41
      %s65 = sphi 0, %s67
      %s68 = sphi 0, %s65
      %s69 = sphi 0, %s68
      %s85 = sphi 0, %s69
    $region4: #{tpu_custom_call.1} parent=1 // loop_header_branch
      %16 = sbr.rel (%p14) target = $region8
    $region5: #{tpu_custom_call.1} parent=1 // loop_body
      %s18 = ssub.s32 %s13, 1
      %s19 = ssub.s32 %s13, 2
      %s26 = sadd.s32 1, %s21
      %p27 = scmp.ge.s32.totalorder %s26, 1
      %s28 = scalar_select %p27, 0, %s26
      %s29 = sadd.s32 1, %s20
      %s30 = scalar_select %p27, %s29, %s20
      %p31 = scmp.ge.s32.totalorder %s30, 2
      %s32 = scalar_select %p31, 0, %s30
      %s33 = ssub.s32 %s20, %s32
      %s34 = ssub.s32 %s21, %s28
      %s35 = sor.u32 %s33, %s34
      %p36 = scmp.eq.s32.totalorder %s35, 0
      %s38 = sadd.s32 %s37, 1
      %s39 = scalar_select %p36, %s37, %s38
      %p42 = pneg %p36
      %p43 = scmp.eq.s32.totalorder %s13, 1
      %p44 = por %p42, %p43
      %p45 = scmp.ne.s32.totalorder %s37, %s40
      %p46 = scmp.eq.s32.totalorder %s13, 0
      %p47 = por %p45, %p46
      %p48 = scmp.ne.s32.totalorder %s37, %s40
      %p49 = scmp.eq.s32.totalorder %s18, 1
      %p50 = por %p48, %p49
      %p51 = scmp.ne.s32.totalorder %s40, %s41
      %p52 = scmp.eq.s32.totalorder %s18, 0
      %p53 = por %p51, %p52
      %p54 = scmp.ne.s32.totalorder %s40, %s41
      %p55 = scmp.eq.s32.totalorder %s19, 1
      %p56 = por %p54, %p55
      %p58 = scmp.ne.s32.totalorder %s41, %s57
      %p59 = scmp.eq.s32.totalorder %s19, 0
      %p60 = por %p58, %p59
      %s61 = ssub.s32 %s20, %s32
      %s62 = ssub.s32 %s21, %s28
      %s63 = sor.u32 %s61, %s62
      %p64 = scmp.eq.s32.totalorder %s63, 0
      %s66 = sadd.s32 %s65, 1
      %s67 = scalar_select %p64, %s65, %s66
      %p70 = pneg %p64
      %p71 = scmp.eq.s32.totalorder %s13, 1
      %p72 = por %p70, %p71
      %p73 = scmp.ne.s32.totalorder %s65, %s68
      %p74 = scmp.eq.s32.totalorder %s13, 0
      %p75 = por %p73, %p74
      %p76 = scmp.ne.s32.totalorder %s65, %s68
      %p77 = scmp.eq.s32.totalorder %s18, 1
      %p78 = por %p76, %p77
      %p79 = scmp.ne.s32.totalorder %s68, %s69
      %p80 = scmp.eq.s32.totalorder %s18, 0
      %p81 = por %p79, %p80
      %p82 = scmp.ne.s32.totalorder %s68, %s69
      %p83 = scmp.eq.s32.totalorder %s19, 1
      %p84 = por %p82, %p83
      %p86 = scmp.ne.s32.totalorder %s69, %s85
      %p87 = scmp.eq.s32.totalorder %s19, 0
      %p88 = por %p86, %p87
      %p89 = scmp.le.s32.totalorder 1, %s13
      %p90 = scmp.lt.s32.totalorder %s13, 3
      %p91 = pnand %p89, %p90
      %p92 = pneg %p91
      // Predicated region
      $region9: #{tpu_custom_call.1} parent=5 // pred_check
        _
      $region10: #{tpu_custom_call.1} parent=5 // pred_check_branch
        %94 = sbr.rel (%p91) target = $region12
      $region11: #{tpu_custom_call.1} parent=5 // pred_region
        %s95 = ssub.s32 %s13, 1
      $region12: #{tpu_custom_call.1} parent=5 // pred_fallthru
        _
      %p96 = scmp.lt.s32.totalorder %s13, 2
      // Predicated region
      $region13: #{tpu_custom_call.1} parent=5 // pred_check
        %p97 = pneg %p96
      $region14: #{tpu_custom_call.1} parent=5 // pred_check_branch
        %99 = sbr.rel (%p97) target = $region16
      $region15: #{tpu_custom_call.1} parent=5 // pred_region
        // Predicated region
        $region17: #{tpu_custom_call.1} parent=15 // pred_check
          %p100 = pneg %p47
        $region18: #{tpu_custom_call.1} parent=15 // pred_check_branch
          %102 = sbr.rel (%p100) target = $region20
        $region19: #{tpu_custom_call.1} parent=15 // pred_region
          %s103 = sand.u32 %s37, 1
          %s104 = scalar_lea.sflag [#allocation3], %s103
          %s105 = sand.u32 %s37, 1
          %s106 = smul.addr %s105, 8
          %s107 = scalar_lea.vmem [#allocation2], %s106
          %s108 = smul.u32 2, %s21
          %s110 = ssub.s32 128, 128
          %111 = vsyncadd %s104, %s110
          %s112 = smul.addr %s20, 2
          %s113 = sadd.s32 %s108, %s112
          %s114 = smul.addr %s113, 64
          %s115 = scalar_lea.hbm %s0, %s114
          %s117 = sshll.u32 %s107, 4
          %s118 = int_to_ptr.vmem [resolvable:$true] %s117
          %120 = dma.hbm_to_vmem [thread:$0]  %s115, 128, %s118, %s104
        $region20: #{tpu_custom_call.1} parent=15 // pred_fallthru
          _
      $region16: #{tpu_custom_call.1} parent=5 // pred_fallthru
        _
      %p121 = scmp.le.s32.totalorder 1, %s13
      %p122 = scmp.lt.s32.totalorder %s13, 3
      %p123 = pnand %p121, %p122
      %p124 = pneg %p123
      // Predicated region
      $region21: #{tpu_custom_call.1} parent=5 // pred_check
        _
      $region22: #{tpu_custom_call.1} parent=5 // pred_check_branch
        %126 = sbr.rel (%p123) target = $region24
      $region23: #{tpu_custom_call.1} parent=5 // pred_region
        %s127 = ssub.s32 %s13, 1
        %s128 = sand.u32 %s40, 1
        %s129 = scalar_lea.sflag [#allocation3], %s128
        %s130 = sand.u32 %s40, 1
        %s131 = smul.addr %s130, 8
        %s132 = scalar_lea.vmem [#allocation2], %s131
        // Predicated region
        $region25: #{tpu_custom_call.1} parent=23 // pred_check
          %p133 = pneg %p53
        $region26: #{tpu_custom_call.1} parent=23 // pred_check_branch
          %135 = sbr.rel (%p133) target = $region28
        $region27: #{tpu_custom_call.1} parent=23 // pred_region
          %136 = dma.done %s129, 128
        $region28: #{tpu_custom_call.1} parent=23 // pred_fallthru
          _
        %s137 = sand.u32 %s40, 1
        %s138 = scalar_lea.sflag [#allocation3], %s137
        %s139 = sand.u32 %s40, 1
        %s140 = smul.addr %s139, 8
        %s141 = scalar_lea.vmem [#allocation2], %s140
        %p142 = pneg %p53
        %p143 = pneg %p50
        %p144 = pneg %p81
        %p145 = pneg %p78
        %s146 = sand.u32 %s68, 1
        %s147 = scalar_lea.sflag [#allocation4], %s146
        %s148 = sand.u32 %s68, 1
        %s149 = smul.addr %s148, 8
        %s150 = scalar_lea.vmem [#allocation5], %s149
        %s151 = smul.u32 2, %s23
        %s152 = smul.u32 2, %s23
        %v153 = vld [vmem:[%s132] sm:$0xff]
        %v154 = vmul.f32 %v153, %v153
        %v156 = vcombine.high %v154, %v154
        %vm158 = vcmask 1043456
        %v159 = vsel %vm158, %v154, 0.0
        %v160 = vrot.slane %v159, 4
        %v161 = vadd.f32 %v159, %v160
        %v162 = vrot.slane %v161, 2
        %v163 = vadd.f32 %v161, %v162
        %v164 = vrot.slane %v163, 1
        %v165 = vadd.f32 %v163, %v164
        %v166 = vsel %vm158, %v156, 0.0
        %v167 = vrot.slane %v166, 4
        %v168 = vadd.f32 %v166, %v167
        %v169 = vrot.slane %v168, 2
        %v170 = vadd.f32 %v168, %v169
        %v171 = vrot.slane %v170, 1
        %v172 = vadd.f32 %v170, %v171
        %v173 = vrsqrt.pop %v165
        %v174 = vrsqrt.pop %v172
        %v177 = vcombine.low %v173, %v174
        %v179 = vmul.f32 %v153, %v177
        %180 = vst [vmem:[%s150] sm:$0xff] %v179
        %s181 = sand.u32 %s68, 1
        %s182 = scalar_lea.sflag [#allocation4], %s181
        %s183 = sand.u32 %s68, 1
        %s184 = smul.addr %s183, 8
        %s185 = scalar_lea.vmem [#allocation5], %s184
        // Predicated region
        $region29: #{tpu_custom_call.1} parent=23 // pred_check
          %p186 = pneg %p78
        $region30: #{tpu_custom_call.1} parent=23 // pred_check_branch
          %188 = sbr.rel (%p186) target = $region32
        $region31: #{tpu_custom_call.1} parent=23 // pred_region
          %s189 = smul.u32 2, %s23
          %s191 = ssub.s32 128, 128
          %192 = vsyncadd %s182, %s191
          %s193 = smul.addr %s22, 2
          %s194 = sadd.s32 %s189, %s193
          %s195 = smul.addr %s194, 64
          %s196 = scalar_lea.hbm %s1, %s195
          %s198 = sshll.u32 %s185, 4
          %s199 = int_to_ptr.vmem [resolvable:$true] %s198
          %201 = dma.vmem_to_hbm [thread:$0]  %s199, 128, %s196, %s182
        $region32: #{tpu_custom_call.1} parent=23 // pred_fallthru
          _
      $region24: #{tpu_custom_call.1} parent=5 // pred_fallthru
        _
      %p202 = scmp.le.s32.totalorder 2, %s13
      // Predicated region
      $region33: #{tpu_custom_call.1} parent=5 // pred_check
        %p203 = pneg %p202
      $region34: #{tpu_custom_call.1} parent=5 // pred_check_branch
        %205 = sbr.rel (%p203) target = $region36
      $region35: #{tpu_custom_call.1} parent=5 // pred_region
        %s206 = ssub.s32 %s13, 2
        // Predicated region
        $region37: #{tpu_custom_call.1} parent=35 // pred_check
          %p207 = pneg %p84
        $region38: #{tpu_custom_call.1} parent=35 // pred_check_branch
          %209 = sbr.rel (%p207) target = $region40
        $region39: #{tpu_custom_call.1} parent=35 // pred_region
          %s210 = sand.u32 %s69, 1
          %s211 = scalar_lea.sflag [#allocation4], %s210
          %s212 = sand.u32 %s69, 1
          %s213 = smul.addr %s212, 8
          %s214 = scalar_lea.vmem [#allocation5], %s213
          %215 = dma.done %s211, 128
        $region40: #{tpu_custom_call.1} parent=35 // pred_fallthru
          _
      $region36: #{tpu_custom_call.1} parent=5 // pred_fallthru
        _
    $region6: #{tpu_custom_call.1} parent=1 // loop_footer
      %s17 = sadd.s32 1, %s13
    $region7: #{tpu_custom_call.1} parent=1 // loop_footer_branch
      %12 = sbr.rel target = $region3
    $region8: #{tpu_custom_call.1} parent=1 // loop_exit
      _
    %216 = vsyncpa [#allocation3], 1
    %s217 = scalar_lea.sflag [#allocation3], 1
    %218 = vsyncpa %s217, 1
    %219 = vsyncpa [#allocation4], 1
    %s220 = scalar_lea.sflag [#allocation4], 1
    %221 = vsyncpa %s220, 1

</llo_original>
